<compile_context>
chip_gen: v6e
topology: v6e:2x2x1
jax: 0.10.0
libtpu: 0.0.40
codegen_flags: <defaults>
</compile_context>

<pallas_src>
import functools
import math

import jax
import jax.numpy as jnp
from jax import lax
from jax.experimental import pallas as pl
from jax.experimental.pallas import tpu as pltpu

LANES = 128
SUBLANES = 8                      # f32 accumulator tile (8,128) == exactly one vreg

_TARGET_BLOCK_BYTES = 8 << 20     # 8 MiB HBM->VMEM blocks (amortize ~0.35us/grid-step)
_VMEM_LIMIT_BYTES = 32 << 20      # 2 x 8 MiB double-buffered input + headroom; <= physical on v5e/v6e/v7x
_SPLIT_MIN_BYTES = 1 << 20        # split single-block inputs >= 1 MiB into 2 grid steps (v7x megacore)
_UNROLL = 4                       # in-kernel chunk-loop unroll


def _softplus(x):
    # log(1 + exp(x)), overflow-safe (stable form recommended by the perf review).
    return jnp.maximum(x, 0.0) + jnp.log1p(jnp.exp(-jnp.abs(x)))


# f-GAN output activations g_f (Nowozin et al. 2016), expressed with jnp ops usable
# inside the kernel.  Same dict is used by the pure-JAX reference.
ACTIVATIONS = {
    "KLD": lambda v: v,
    "RKL": lambda v: -jnp.exp(-v),
    "CHI": lambda v: v,
    "SQH": lambda v: 1.0 - jnp.exp(-v),
    "JSD": lambda v: math.log(2.0) - _softplus(-v),   # log2 - log1p(exp(-v))
    "GAN": lambda v: -_softplus(-v),                  # -log1p(exp(-v))
    "TVD": lambda v: 0.5 * jnp.tanh(v),
}

# act(0) as exact Python constants — used to correct the zero padding in the wrapper.
_ACT_AT_ZERO = {
    "KLD": 0.0, "RKL": -1.0, "CHI": 0.0, "SQH": 0.0,
    "JSD": 0.0, "GAN": -math.log(2.0), "TVD": 0.0,
}


def _round_up(x, m):
    return ((x + m - 1) // m) * m


def _v_loss_kernel(v_ref, partial_ref, *, act_fn, block_rows, chunk_rows, rows, n_blocks):
    """One grid step: activation + streaming reduce of a (block_rows,128) slab into a
    lane-dense (8,128) f32 partial sum held in a single vreg accumulator."""

    def chunk_sum(start, nrows):
        x = v_ref[pl.ds(start, nrows), :]
        a = act_fn(x.astype(jnp.float32))
        # (nrows,128) -> (nrows//8, 8, 128): pure sublane regrouping, VPU adds only.
        return jnp.sum(a.reshape(nrows // SUBLANES, SUBLANES, LANES), axis=0)

    def body(k, acc):
        start = pl.multiple_of(k * chunk_rows, chunk_rows)
        return acc + chunk_sum(start, chunk_rows)

    zero = jnp.zeros((SUBLANES, LANES), jnp.float32)

    def run(valid_rows):
        # Streaming accumulation over row-chunks (no block-sized activation temp).
        n_full = valid_rows // chunk_rows
        tail = valid_rows - n_full * chunk_rows
        if n_full == 0:
            acc = zero
        elif n_full == 1:
            acc = body(0, zero)
        else:
            acc = lax.fori_loop(0, n_full, body, zero, unroll=min(_UNROLL, n_full))
        if tail:  # static tail (multiple of 8/16 rows), no masking needed
            acc = acc + chunk_sum(n_full * chunk_rows, tail)
        return acc

    valid_last = rows - (n_blocks - 1) * block_rows   # static
    if n_blocks == 1:
        partial_ref[...] = run(valid_last)
    elif valid_last == block_rows:
        # Grid tiles the row dim exactly: single unmasked fast path, no branch.
        partial_ref[...] = run(block_rows)
    else:
        # Only the last block is short; it just reads fewer (valid) rows — the OOB
        # portion of the boundary block is never touched, so no iota/compare/where.
        is_last = pl.program_id(0) == n_blocks - 1

        @pl.when(jnp.logical_not(is_last))
        def _():
            partial_ref[...] = run(block_rows)

        @pl.when(is_last)
        def _():
            partial_ref[...] = run(valid_last)


class VLossPallas:
    """Pallas TPU implementation of V_loss.forward (no learnable parameters)."""

    def __init__(self, chosen_divergence: str = "JSD"):
        if chosen_divergence not in ACTIVATIONS:
            raise ValueError(f"unknown divergence {chosen_divergence!r}")
        self.chosen_divergence = chosen_divergence

    def __call__(self, v: jax.Array) -> jax.Array:
        act_fn = ACTIVATIONS[self.chosen_divergence]
        total_n = int(math.prod(v.shape))
        if total_n == 0:                       # torch.mean of an empty tensor -> nan
            return jnp.float32(float("nan"))

        dtype = v.dtype
        if dtype == jnp.float32:
            sub = 8                            # native f32 sublane tiling
        elif dtype in (jnp.bfloat16, jnp.float16):
            sub = 16                           # packed 16-bit tiling (16,128)
        else:
            v = v.astype(jnp.float32)
            dtype = v.dtype
            sub = 8
        itemsize = jnp.dtype(dtype).itemsize
        row_bytes = LANES * itemsize

        # Flatten to a lane-dense (rows, 128) slab.  For contiguous inputs whose element
        # count is a multiple of 128 (e.g. the (2,4,16,16) test case) this is a bitcast;
        # only misaligned inputs pay the pad copy, corrected exactly with act(0) below.
        flat = v.reshape(-1)
        tile = sub * LANES
        padded_n = _round_up(total_n, tile)
        pad_count = padded_n - total_n
        if pad_count:
            flat = jnp.pad(flat, (0, pad_count))
        rows = padded_n // LANES               # multiple of `sub`
        v2d = flat.reshape(rows, LANES)

        # Tiling: large streaming blocks (byte-capped), chunked inside the kernel.
        chunk_rows = min(8 * sub, rows)        # 32 KiB chunks (8 vregs f32 in flight)
        cap_rows = max(chunk_rows,
                       (_TARGET_BLOCK_BYTES // row_bytes) // chunk_rows * chunk_rows)
        block_rows = min(rows, cap_rows)
        n_blocks = pl.cdiv(rows, block_rows)
        # v7x megacore: make sure mid-size inputs split across >= 2 grid steps
        # (each half >= ~512 KiB so the extra grid-step overhead stays negligible).
        if n_blocks == 1 and rows * row_bytes >= _SPLIT_MIN_BYTES:
            block_rows = _round_up(pl.cdiv(rows, 2), sub)
            n_blocks = pl.cdiv(rows, block_rows)

        kernel = functools.partial(
            _v_loss_kernel,
            act_fn=act_fn,
            block_rows=block_rows,
            chunk_rows=chunk_rows,
            rows=rows,
            n_blocks=n_blocks,
        )

        partials = pl.pallas_call(
            kernel,
            out_shape=jax.ShapeDtypeStruct((n_blocks * SUBLANES, LANES), jnp.float32),
            grid_spec=pl.GridSpec(
                grid=(n_blocks,),
                in_specs=[pl.BlockSpec((block_rows, LANES), lambda i: (i, 0))],
                out_specs=pl.BlockSpec((SUBLANES, LANES), lambda i: (i, 0)),
            ),
            compiler_params=pltpu.CompilerParams(
                dimension_semantics=("parallel",),       # independent partial sums
                vmem_limit_bytes=_VMEM_LIMIT_BYTES,      # cover 2x8 MiB double-buffering
            ),
        )(v2d)

        # Tiny epilogue: one cross-lane reduce over n_blocks*8*128 floats, exact pad
        # correction, and a multiply by the precomputed reciprocal of N.
        total = jnp.sum(partials)
        if pad_count:
            total = total - jnp.float32(pad_count * _ACT_AT_ZERO[self.chosen_divergence])
        return total * jnp.float32(1.0 / total_n)


def _v_loss_ref(v, chosen_divergence):
    return jnp.mean(ACTIVATIONS[chosen_divergence](v.astype(jnp.float32)))


if __name__ == "__main__":
    key = jax.random.PRNGKey(0)
    k1, k2, k3 = jax.random.split(key, 3)

    test_inputs = {
        # primary: NCHW-like small discriminator output (single block, no pad, no copy)
        "nchw_f32": jax.random.normal(k1, (2, 4, 16, 16), dtype=jnp.float32),
        # element count not a multiple of 128 -> zero-pad path + exact act(0) correction
        "odd_f32": jax.random.normal(k2, (3, 5, 7, 11), dtype=jnp.float32),
        # ~1 MiB -> 2-block megacore split, pl.when short-last-block path,
        # in-kernel streaming fori_loop + static tail chunk
        "mid_f32": jax.random.normal(k3, (257, 1024), dtype=jnp.float32),
        # bf16 input -> (16,128)-aligned tiling, f32 accumulation
        "nchw_bf16": jax.random.normal(k1, (2, 4, 16, 16), dtype=jnp.bfloat16),
    }

    ok = True
    for div in ("JSD", "GAN", "KLD", "SQH", "RKL", "TVD", "CHI"):
        loss_mod = VLossPallas(chosen_divergence=div)
        for name, x in test_inputs.items():
            out = jax.block_until_ready(loss_mod(x))
            ref = _v_loss_ref(x, div)
            if not jnp.allclose(out, ref, rtol=1e-4, atol=1e-5):
                ok = False
                print(f"MISMATCH div={div} input={name}: pallas={out} ref={ref}")

    if ok:
        print("KERNEL_OK")
</pallas_src>

<mosaic_0001>
module attributes {stable_mosaic.version = 11 : i64} {
  func.func @_v_loss_kernel(%arg0: i32, %arg1: memref<16x128xf32, #tpu.memory_space<vmem>>, %arg2: memref<8x128xf32, #tpu.memory_space<vmem>>) attributes {dimension_semantics = [#tpu.dimension_semantics<parallel>], iteration_bounds = array<i64: 1>, scalar_prefetch = 0 : i64, scratch_operands = 0 : i64, tpu.core_type = #tpu.core_type<tc>, window_params = [{transform_indices = @transform_0, window_bounds = array<i64: 16, 128>}, {transform_indices = @transform_1, window_bounds = array<i64: 8, 128>}]} {
    %cst = arith.constant 0.000000e+00 : f32
    %0 = vector.broadcast %cst : f32 to vector<8x128xf32>
    %c0_i32 = arith.constant 0 : i32
    %1 = tpu.assume_multiple %c0_i32, 16 : i32
    %2 = arith.index_cast %1 : i32 to index
    %c0 = arith.constant 0 : index
    %3 = vector.load %arg1[%2, %c0] : memref<16x128xf32, #tpu.memory_space<vmem>>, vector<16x128xf32>
    %cst_0 = arith.constant 0.000000e+00 : f32
    %4 = vector.broadcast %cst_0 : f32 to vector<16x128xf32>
    %5 = arith.subf %4, %3 : vector<16x128xf32>
    %cst_1 = arith.constant 0.000000e+00 : f32
    %6 = vector.broadcast %cst_1 : f32 to vector<16x128xf32>
    %7 = arith.maximumf %5, %6 : vector<16x128xf32>
    %8 = math.absf %5 : vector<16x128xf32>
    %cst_2 = arith.constant 0.000000e+00 : f32
    %9 = vector.broadcast %cst_2 : f32 to vector<16x128xf32>
    %10 = arith.subf %9, %8 : vector<16x128xf32>
    %11 = math.exp %10 : vector<16x128xf32>
    %12 = math.log1p %11 : vector<16x128xf32>
    %13 = arith.addf %7, %12 : vector<16x128xf32>
    %cst_3 = arith.constant 0.693147182 : f32
    %14 = vector.broadcast %cst_3 : f32 to vector<16x128xf32>
    %15 = arith.subf %14, %13 : vector<16x128xf32>
    %16 = vector.shape_cast %15 : vector<16x128xf32> to vector<2x8x128xf32>
    %cst_4 = arith.constant dense<0.000000e+00> : vector<8x128xf32>
    %17 = vector.multi_reduction <add>, %16, %cst_4 [0] : vector<2x8x128xf32> to vector<8x128xf32>
    %18 = arith.addf %0, %17 : vector<8x128xf32>
    %c0_5 = arith.constant 0 : index
    %c0_6 = arith.constant 0 : index
    %19 = vector.load %arg2[%c0_5, %c0_6] : memref<8x128xf32, #tpu.memory_space<vmem>>, vector<8x128xf32>
    tpu.vector_store %arg2[%c0_5, %c0_6], %18 {strides = array<i32>} : memref<8x128xf32, #tpu.memory_space<vmem>>, vector<8x128xf32>,
    return
  }
  func.func @transform_0(%arg0: i32) -> (i32, i32) {
    %c0_i32 = arith.constant 0 : i32
    %c0_i32_0 = arith.constant 0 : i32
    return %arg0, %c0_i32 : i32, i32
  }
  func.func @transform_1(%arg0: i32) -> (i32, i32) {
    %c0_i32 = arith.constant 0 : i32
    %c0_i32_0 = arith.constant 0 : i32
    return %arg0, %c0_i32 : i32, i32
  }
}

</mosaic_0001>

<llo_original>
// kernel: tpu_custom_call.1
$region0: #{tpu_custom_call.1}
  #allocation0 [shape = 'u32[]', space=smem, size = 0x4, offset = 0x4, fixed_abs, tag = 'smem constant byte address 0x4 - core index']
  #allocation1 [shape = 'u32[144,128]{1,0:T(1,128)}', space=vmem, size = 0x12000, scoped, tag = 'internal scratch']
  %s0 = inlined_call_operand.hbm [shape: f32[16,128], index: 0, kind: input, shape index: {}]
  %s1 = inlined_call_operand.hbm [shape: f32[8,128], index: 1, kind: output, shape index: {}]
  %s2 = sld [smem:[#allocation0]]
  $region18: #{tpu_custom_call.1} parent=0
    _
  %s4 = ssub.s32 1, %s2
  %s5 = scalar_select 0, %s4, %s2
  $region1: #{tpu_custom_call.1} parent=0
    #allocation2 [shape = 'u8[8192]{0}', space=vmem, size = 0x2000, scoped, tag = 'input window, operand 0, single buffered']
    #allocation3 [shape = 's32[1]{0}', space=sflag, size = 0x4, scoped, tag = 'scoped memory for tpu_custom_call.1']
    #allocation4 [shape = 's32[1]{0}', space=sflag, size = 0x4, scoped, tag = 'scoped memory for tpu_custom_call.1']
    #allocation5 [shape = 'u8[4096]{0}', space=vmem, size = 0x1000, scoped, tag = 'output window, operand 0, single buffered']
    %6 = vsyncpa [#allocation3], 0
    %7 = vsyncpa [#allocation4], 0
    // Predicated region
    $region2: #{tpu_custom_call.1} parent=1 // pred_check
      _
    $region3: #{tpu_custom_call.1} parent=1 // pred_check_branch
      %9 = sbr.rel (0) target = $region5
    $region4: #{tpu_custom_call.1} parent=1 // pred_region
      %s11 = ssub.s32 256, 256
      %12 = vsyncadd [#allocation3], %s11
      %s13 = sshll.u32 [#allocation2], 4
      %s14 = int_to_ptr.vmem [resolvable:$true] %s13
      %19 = dma.hbm_to_vmem [thread:$0]  %s0, 256, %s14, [#allocation3], 128, 128, 8
    $region5: #{tpu_custom_call.1} parent=1 // pred_fallthru
      _
    // Predicated region
    $region6: #{tpu_custom_call.1} parent=1 // pred_check
      _
    $region7: #{tpu_custom_call.1} parent=1 // pred_check_branch
      %21 = sbr.rel (0) target = $region9
    $region8: #{tpu_custom_call.1} parent=1 // pred_region
      %22 = dma.done [#allocation3], 256
    $region9: #{tpu_custom_call.1} parent=1 // pred_fallthru
      _
    %v23 = vld [vmem:[#allocation2] sm:$0xff]
    %v24 = vld [vmem:[#allocation2 + $0x8] sm:$0xff]
    %v25 = vsub.f32 0.0, %v23
    %v26 = vsub.f32 0.0, %v24
    %v27 = vmax.f32 %v25, 0.0
    %v28 = vmax.f32 %v26, 0.0
    %v29 = vand.u32 2147483647, %v25
    %v30 = vand.u32 2147483647, %v26
    %v31 = vsub.f32 0.0, %v29
    %v32 = vsub.f32 0.0, %v30
    %v33 = vmul.f32 %v31, 1.442695
    %v34 = vpow.pop %v33
    %v35 = vmul.f32 %v32, 1.442695
    %v36 = vpow.pop %v35
    %v37 = vadd.f32 %v34, 1.0
    %v38 = vlog2.pop %v37
    %v39 = vmul.f32 %v38, 0.6931472
    %v40 = vmul.f32 -0.5, %v34
    %v41 = vadd.f32 %v40, 1.0
    %v42 = vmul.f32 %v41, %v34
    %v43 = vand.u32 2147483647, %v34
    %vm44 = vcmp.lt.f32.partialorder %v43, 0.0004427343
    %v45 = vsel %vm44, %v42, %v39
    %v46 = vadd.f32 %v36, 1.0
    %v47 = vlog2.pop %v46
    %v48 = vmul.f32 %v47, 0.6931472
    %v49 = vmul.f32 -0.5, %v36
    %v50 = vadd.f32 %v49, 1.0
    %v51 = vmul.f32 %v50, %v36
    %v52 = vand.u32 2147483647, %v36
    %vm53 = vcmp.lt.f32.partialorder %v52, 0.0004427343
    %v54 = vsel %vm53, %v51, %v48
    %v55 = vadd.f32 %v27, %v45
    %v56 = vadd.f32 %v28, %v54
    %v57 = vsub.f32 0.6931472, %v55
    %v58 = vsub.f32 0.6931472, %v56
    %v59 = vadd.f32 %v57, %v58
    %v60 = vadd.f32 %v59, 0.0
    %61 = vst [vmem:[#allocation5] sm:$0xff] %v60
    // Predicated region
    $region10: #{tpu_custom_call.1} parent=1 // pred_check
      _
    $region11: #{tpu_custom_call.1} parent=1 // pred_check_branch
      %63 = sbr.rel (0) target = $region13
    $region12: #{tpu_custom_call.1} parent=1 // pred_region
      %s65 = ssub.s32 128, 128
      %66 = vsyncadd [#allocation4], %s65
      %s68 = sshll.u32 [#allocation5], 4
      %s69 = int_to_ptr.vmem [resolvable:$true] %s68
      %71 = dma.vmem_to_hbm [thread:$0]  %s69, 128, %s1, [#allocation4]
    $region13: #{tpu_custom_call.1} parent=1 // pred_fallthru
      _
    // Predicated region
    $region14: #{tpu_custom_call.1} parent=1 // pred_check
      _
    $region15: #{tpu_custom_call.1} parent=1 // pred_check_branch
      %73 = sbr.rel (0) target = $region17
    $region16: #{tpu_custom_call.1} parent=1 // pred_region
      %74 = dma.done [#allocation4], 128
    $region17: #{tpu_custom_call.1} parent=1 // pred_fallthru
      _
    %75 = vsyncpa [#allocation3], 1
    %76 = vsyncpa [#allocation4], 1

</llo_original>
